<compile_context>
chip_gen: v7x
topology: tpu7x:2x2x1
jax: 0.10.0
libtpu: 0.0.40
codegen_flags: <defaults>
</compile_context>

<pallas_src>
import jax
import jax.numpy as jnp
from jax.experimental import pallas as pl
from jax.experimental.pallas import tpu as pltpu


# --------------------------- kernels ---------------------------

def _pool_repeat_kernel(x_ref, se_ref, so_ref, o_ref):
    """2x2/stride-2 max-pool fused with channel repeat.

    x_ref : (1, Cin*Ho, 2*W)   row (c*Ho + i) = [x[c,2i,0:W], x[c,2i+1,0:W]]
    se_ref: (W, Wo)            selection matrix picking even columns
    so_ref: (W, Wo)            selection matrix picking odd columns
    o_ref : (1, Cout*Ho, Wo)   rows ordered (repeat k, channel c, row i)
    """
    m = x_ref.shape[1]
    w = x_ref.shape[2] // 2
    r = o_ref.shape[1] // m

    x = x_ref[0]                                        # (M, 2W)
    # vertical pair max: two lane-aligned half-width slices + VPU max
    vmax = jnp.maximum(x[:, :w], x[:, w:])              # (M, W)
    # horizontal pair max: exact 0/1 selection matmuls (MXU) + VPU max
    even = jnp.dot(vmax, se_ref[...], preferred_element_type=jnp.float32)
    odd = jnp.dot(vmax, so_ref[...], preferred_element_type=jnp.float32)
    pooled = jnp.maximum(even, odd)                     # (M, Wo)

    # fused channel repeat: write each of the r copies once (static slices)
    for k in range(r):
        o_ref[0, k * m:(k + 1) * m, :] = pooled


def _repeat_kernel(x_ref, o_ref):
    """Channel repeat only (downsample=False, Cout != Cin).

    x_ref: (1, Cin, H*W)    o_ref: (1, Cout, H*W)
    """
    cin = x_ref.shape[1]
    r = o_ref.shape[1] // cin
    x = x_ref[0]
    for k in range(r):
        o_ref[0, k * cin:(k + 1) * cin, :] = x


# --------------------------- wrapper ---------------------------

def _vmem_limit(*nbytes):
    total = int(sum(nbytes))
    # double-buffered blocks + slack; clamp to a safe floor / physical ceiling
    return int(min(100 * 1024 * 1024, max(16 * 1024 * 1024, 2 * total + (2 << 20))))


def encoder_other_path_pallas(x_nchw, input_channels, output_channels, downsample):
    """EncoderOtherPath forward.  x_nchw: (N, Cin, H, W) float32, NCHW (PyTorch layout)."""
    N, Cin, H, W = x_nchw.shape
    assert Cin == input_channels
    assert output_channels % input_channels == 0
    r = output_channels // input_channels
    x = x_nchw.astype(jnp.float32)

    if not downsample:
        if r == 1:
            return x  # identity: module returns its input unchanged

        hw = H * W
        x3 = x.reshape(N, Cin, hw)                      # free, contiguous
        in_blk = Cin * hw * 4
        out_blk = output_channels * hw * 4
        out = pl.pallas_call(
            _repeat_kernel,
            out_shape=jax.ShapeDtypeStruct((N, output_channels, hw), jnp.float32),
            grid=(N,),
            in_specs=[pl.BlockSpec((1, Cin, hw), lambda n: (n, 0, 0))],
            out_specs=pl.BlockSpec((1, output_channels, hw), lambda n: (n, 0, 0)),
            compiler_params=pltpu.CompilerParams(
                dimension_semantics=("parallel",),
                vmem_limit_bytes=_vmem_limit(in_blk, out_blk)),
            cost_estimate=pl.CostEstimate(
                flops=0, transcendentals=0,
                bytes_accessed=N * (in_blk + out_blk)),
        )(x3)
        return out.reshape(N, output_channels, H, W)    # free, contiguous

    # downsample path: 2x2 stride-2 max-pool fused with the channel repeat
    assert H % 2 == 0 and W % 2 == 0
    Ho, Wo = H // 2, W // 2
    M = Cin * Ho
    x3 = x.reshape(N, M, 2 * W)                         # free, contiguous (rows = (c, i))

    cols = jnp.arange(Wo)
    s_even = jnp.zeros((W, Wo), jnp.float32).at[2 * cols, cols].set(1.0)
    s_odd = jnp.zeros((W, Wo), jnp.float32).at[2 * cols + 1, cols].set(1.0)

    in_blk = M * 2 * W * 4
    out_blk = output_channels * Ho * Wo * 4
    sel_bytes = 2 * W * Wo * 4

    out = pl.pallas_call(
        _pool_repeat_kernel,
        out_shape=jax.ShapeDtypeStruct((N, output_channels * Ho, Wo), jnp.float32),
        grid=(N,),
        in_specs=[pl.BlockSpec((1, M, 2 * W), lambda n: (n, 0, 0)),
                  pl.BlockSpec((W, Wo), lambda n: (0, 0)),
                  pl.BlockSpec((W, Wo), lambda n: (0, 0))],
        out_specs=pl.BlockSpec((1, output_channels * Ho, Wo), lambda n: (n, 0, 0)),
        compiler_params=pltpu.CompilerParams(
            dimension_semantics=("parallel",),
            vmem_limit_bytes=_vmem_limit(in_blk, out_blk, sel_bytes)),
        cost_estimate=pl.CostEstimate(
            flops=N * (2 * 2 * M * W * Wo + M * W + M * Wo),
            transcendentals=0,
            bytes_accessed=N * (in_blk + out_blk) + sel_bytes),
    )(x3, s_even, s_odd)

    return out.reshape(N, output_channels, Ho, Wo)      # free, contiguous


# --------------------- pure-JAX reference (NCHW, like PyTorch) ---------------------

def encoder_other_path_ref(x, input_channels, output_channels, downsample):
    out = x
    if downsample:
        N, C, H, W = out.shape
        out = out.reshape(N, C, H // 2, 2, W // 2, 2).max(axis=(3, 5))
    if output_channels != input_channels:
        out = jnp.tile(out, (1, output_channels // input_channels, 1, 1))
    return out


if __name__ == "__main__":
    key = jax.random.PRNGKey(0)
    keys = jax.random.split(key, 3)

    # (shape, cin, cout, downsample): typical ENet bottleneck-downsample skip path,
    # a pure channel-repeat path, and the identity path.
    cases = [
        ((2, 4, 16, 16), 4, 16, True),
        ((2, 8, 16, 16), 8, 16, False),
        ((2, 16, 16, 16), 16, 16, False),
    ]

    ok = True
    for kk, (shape, cin, cout, ds) in zip(keys, cases):
        x = jax.random.normal(kk, shape, jnp.float32)
        y = encoder_other_path_pallas(x, cin, cout, ds)
        y = jax.block_until_ready(y)
        y_ref = encoder_other_path_ref(x, cin, cout, ds)
        ok = ok and (y.shape == y_ref.shape)
        ok = ok and bool(jnp.allclose(y, y_ref, atol=1e-5, rtol=1e-5))

    print("KERNEL_OK" if ok else "MISMATCH")
</pallas_src>

<mosaic_0001>
module attributes {stable_mosaic.version = 11 : i64} {
  func.func @_pool_repeat_kernel(%arg0: i32, %arg1: memref<1x32x32xf32, #tpu.memory_space<vmem>>, %arg2: memref<16x8xf32, #tpu.memory_space<vmem>>, %arg3: memref<16x8xf32, #tpu.memory_space<vmem>>, %arg4: memref<1x128x8xf32, #tpu.memory_space<vmem>>) attributes {dimension_semantics = [#tpu.dimension_semantics<parallel>], iteration_bounds = array<i64: 2>, scalar_prefetch = 0 : i64, scratch_operands = 0 : i64, tpu.core_type = #tpu.core_type<tc>, window_params = [{transform_indices = @transform_0, window_bounds = array<i64: 1, 32, 32>}, {pipeline_mode = #tpu.pipeline_mode<synchronous>, transform_indices = @transform_1, window_bounds = array<i64: 16, 8>}, {pipeline_mode = #tpu.pipeline_mode<synchronous>, transform_indices = @transform_2, window_bounds = array<i64: 16, 8>}, {transform_indices = @transform_3, window_bounds = array<i64: 1, 128, 8>}]} {
    %c0 = arith.constant 0 : index
    %c0_0 = arith.constant 0 : index
    %c0_1 = arith.constant 0 : index
    %0 = vector.load %arg1[%c0, %c0_0, %c0_1] : memref<1x32x32xf32, #tpu.memory_space<vmem>>, vector<1x32x32xf32>
    %1 = vector.shape_cast %0 : vector<1x32x32xf32> to vector<32x32xf32>
    %2 = vector.extract_strided_slice %1 {offsets = [0, 0], sizes = [32, 16], strides = [1, 1]} : vector<32x32xf32> to vector<32x16xf32>
    %3 = vector.extract_strided_slice %1 {offsets = [0, 16], sizes = [32, 16], strides = [1, 1]} : vector<32x32xf32> to vector<32x16xf32>
    %4 = arith.maximumf %2, %3 : vector<32x16xf32>
    %c0_2 = arith.constant 0 : index
    %c0_3 = arith.constant 0 : index
    %5 = vector.load %arg2[%c0_2, %c0_3] : memref<16x8xf32, #tpu.memory_space<vmem>>, vector<16x8xf32>
    %cst = arith.constant dense<0.000000e+00> : vector<32x8xf32>
    %6 = tpu.matmul %4, %5, %cst {dimension_numbers = #tpu.dot_dimension_numbers<[1], [0], [0], [1], [0, 0, 1, 1], [], []>} : vector<32x16xf32>, vector<16x8xf32>, vector<32x8xf32> -> vector<32x8xf32>
    %c0_4 = arith.constant 0 : index
    %c0_5 = arith.constant 0 : index
    %7 = vector.load %arg3[%c0_4, %c0_5] : memref<16x8xf32, #tpu.memory_space<vmem>>, vector<16x8xf32>
    %cst_6 = arith.constant dense<0.000000e+00> : vector<32x8xf32>
    %8 = tpu.matmul %4, %7, %cst_6 {dimension_numbers = #tpu.dot_dimension_numbers<[1], [0], [0], [1], [0, 0, 1, 1], [], []>} : vector<32x16xf32>, vector<16x8xf32>, vector<32x8xf32> -> vector<32x8xf32>
    %9 = arith.maximumf %6, %8 : vector<32x8xf32>
    %c0_7 = arith.constant 0 : index
    %c0_8 = arith.constant 0 : index
    %c0_9 = arith.constant 0 : index
    %10 = vector.load %arg4[%c0_7, %c0_8, %c0_9] : memref<1x128x8xf32, #tpu.memory_space<vmem>>, vector<1x32x8xf32>
    %11 = vector.shape_cast %10 : vector<1x32x8xf32> to vector<32x8xf32>
    %12 = vector.shape_cast %9 : vector<32x8xf32> to vector<1x32x8xf32>
    tpu.vector_store %arg4[%c0_7, %c0_8, %c0_9], %12 {strides = array<i32>} : memref<1x128x8xf32, #tpu.memory_space<vmem>>, vector<1x32x8xf32>,
    %c0_10 = arith.constant 0 : index
    %c32 = arith.constant 32 : index
    %c0_11 = arith.constant 0 : index
    %13 = vector.load %arg4[%c0_10, %c32, %c0_11] : memref<1x128x8xf32, #tpu.memory_space<vmem>>, vector<1x32x8xf32>
    %14 = vector.shape_cast %13 : vector<1x32x8xf32> to vector<32x8xf32>
    %15 = vector.shape_cast %9 : vector<32x8xf32> to vector<1x32x8xf32>
    tpu.vector_store %arg4[%c0_10, %c32, %c0_11], %15 {strides = array<i32>} : memref<1x128x8xf32, #tpu.memory_space<vmem>>, vector<1x32x8xf32>,
    %c0_12 = arith.constant 0 : index
    %c64 = arith.constant 64 : index
    %c0_13 = arith.constant 0 : index
    %16 = vector.load %arg4[%c0_12, %c64, %c0_13] : memref<1x128x8xf32, #tpu.memory_space<vmem>>, vector<1x32x8xf32>
    %17 = vector.shape_cast %16 : vector<1x32x8xf32> to vector<32x8xf32>
    %18 = vector.shape_cast %9 : vector<32x8xf32> to vector<1x32x8xf32>
    tpu.vector_store %arg4[%c0_12, %c64, %c0_13], %18 {strides = array<i32>} : memref<1x128x8xf32, #tpu.memory_space<vmem>>, vector<1x32x8xf32>,
    %c0_14 = arith.constant 0 : index
    %c96 = arith.constant 96 : index
    %c0_15 = arith.constant 0 : index
    %19 = vector.load %arg4[%c0_14, %c96, %c0_15] : memref<1x128x8xf32, #tpu.memory_space<vmem>>, vector<1x32x8xf32>
    %20 = vector.shape_cast %19 : vector<1x32x8xf32> to vector<32x8xf32>
    %21 = vector.shape_cast %9 : vector<32x8xf32> to vector<1x32x8xf32>
    tpu.vector_store %arg4[%c0_14, %c96, %c0_15], %21 {strides = array<i32>} : memref<1x128x8xf32, #tpu.memory_space<vmem>>, vector<1x32x8xf32>,
    return
  }
  func.func @transform_0(%arg0: i32) -> (i32, i32, i32) {
    %c0_i32 = arith.constant 0 : i32
    %c0_i32_0 = arith.constant 0 : i32
    %c0_i32_1 = arith.constant 0 : i32
    return %arg0, %c0_i32, %c0_i32_0 : i32, i32, i32
  }
  func.func @transform_1(%arg0: i32) -> (i32, i32) {
    %c0_i32 = arith.constant 0 : i32
    %c0_i32_0 = arith.constant 0 : i32
    %c0_i32_1 = arith.constant 0 : i32
    return %c0_i32, %c0_i32_0 : i32, i32
  }
  func.func @transform_2(%arg0: i32) -> (i32, i32) {
    %c0_i32 = arith.constant 0 : i32
    %c0_i32_0 = arith.constant 0 : i32
    %c0_i32_1 = arith.constant 0 : i32
    return %c0_i32, %c0_i32_0 : i32, i32
  }
  func.func @transform_3(%arg0: i32) -> (i32, i32, i32) {
    %c0_i32 = arith.constant 0 : i32
    %c0_i32_0 = arith.constant 0 : i32
    %c0_i32_1 = arith.constant 0 : i32
    return %arg0, %c0_i32, %c0_i32_0 : i32, i32, i32
  }
}

</mosaic_0001>

<llo_original>
// kernel: tpu_custom_call.1
$region0: #{tpu_custom_call.1}
  #allocation0 [shape = 'u32[]', space=smem, size = 0x4, offset = 0x4, fixed_abs, tag = 'smem constant byte address 0x4 - core index']
  #allocation1 [shape = 'u32[144,128]{1,0:T(1,128)}', space=vmem, size = 0x12000, scoped, tag = 'internal scratch']
  %s0 = inlined_call_operand.hbm [shape: f32[2,32,32], index: 0, kind: input, shape index: {}]
  %s1 = inlined_call_operand.vmem [shape: f32[16,8], index: 1, kind: input, shape index: {}]
  %s2 = inlined_call_operand.vmem [shape: f32[16,8], index: 2, kind: input, shape index: {}]
  %s3 = inlined_call_operand.vmem [shape: f32[2,128,8], index: 3, kind: output, shape index: {}]
  %s4 = sld [smem:[#allocation0]]
  $region49: #{tpu_custom_call.1} parent=0
    _
  %s6 = ssub.s32 1, %s4
  %s7 = scalar_select 0, %s6, %s4
  $region1: #{tpu_custom_call.1} parent=0
    #allocation2 [shape = 'u8[32768]{0}', space=vmem, size = 0x8000, scoped, tag = 'input window, operand 0']
    #allocation3 [shape = 's32[2]{0}', space=sflag, size = 0x8, scoped, tag = 'scoped memory for tpu_custom_call.1']
    %8 = vsyncpa [#allocation3], 0
    %s9 = scalar_lea.sflag [#allocation3], 1
    %10 = vsyncpa %s9, 0
    loop: start=0, step=1, limit=4
    $region2: #{tpu_custom_call.1} parent=1 // loop_pre_header
      _
    $region3: #{tpu_custom_call.1} parent=1 // loop_header
      %s12 = sphi 0, %s16
      %p13 = scmp.ge.s32.totalorder %s12, 4
      %s22 = sphi 0, %s24
      %s25 = sphi 0, %s22
      %s26 = sphi 0, %s25
      %s42 = sphi 0, %s26
      %s46 = sphi 0, %s46
      %s48 = sphi 0, %s46
      %s49 = sphi 0, %s48
      %s63 = sphi 0, %s49
      %s67 = sphi 0, %s67
      %s69 = sphi 0, %s67
      %s70 = sphi 0, %s69
      %s84 = sphi 0, %s70
      %s90 = sphi 0, %s92
      %s93 = sphi 0, %s90
      %s94 = sphi 0, %s93
      %s110 = sphi 0, %s94
    $region4: #{tpu_custom_call.1} parent=1 // loop_header_branch
      %15 = sbr.rel (%p13) target = $region8
    $region5: #{tpu_custom_call.1} parent=1 // loop_body
      %s17 = ssub.s32 %s12, 1
      %s18 = ssub.s32 %s12, 2
      %s19 = sadd.s32 %s12, 1
      %s20 = ssub.s32 %s12, %s19
      %p21 = scmp.eq.s32.totalorder %s20, 0
      %s23 = sadd.s32 %s22, 1
      %s24 = scalar_select %p21, %s22, %s23
      %p27 = pneg %p21
      %p28 = scmp.eq.s32.totalorder %s12, 1
      %p29 = por %p27, %p28
      %p30 = scmp.ne.s32.totalorder %s22, %s25
      %p31 = scmp.eq.s32.totalorder %s12, 0
      %p32 = por %p30, %p31
      %p33 = scmp.ne.s32.totalorder %s22, %s25
      %p34 = scmp.eq.s32.totalorder %s17, 1
      %p35 = por %p33, %p34
      %p36 = scmp.ne.s32.totalorder %s25, %s26
      %p37 = scmp.eq.s32.totalorder %s17, 0
      %p38 = por %p36, %p37
      %p39 = scmp.ne.s32.totalorder %s25, %s26
      %p40 = scmp.eq.s32.totalorder %s18, 1
      %p41 = por %p39, %p40
      %p43 = scmp.ne.s32.totalorder %s26, %s42
      %p44 = scmp.eq.s32.totalorder %s18, 0
      %p45 = por %p43, %p44
      %s47 = sadd.s32 %s46, 1
      %p50 = scmp.eq.s32.totalorder %s12, 1
      %p51 = scmp.ne.s32.totalorder %s46, %s48
      %p52 = scmp.eq.s32.totalorder %s12, 0
      %p53 = por %p51, %p52
      %p54 = scmp.ne.s32.totalorder %s46, %s48
      %p55 = scmp.eq.s32.totalorder %s17, 1
      %p56 = por %p54, %p55
      %p57 = scmp.ne.s32.totalorder %s48, %s49
      %p58 = scmp.eq.s32.totalorder %s17, 0
      %p59 = por %p57, %p58
      %p60 = scmp.ne.s32.totalorder %s48, %s49
      %p61 = scmp.eq.s32.totalorder %s18, 1
      %p62 = por %p60, %p61
      %p64 = scmp.ne.s32.totalorder %s49, %s63
      %p65 = scmp.eq.s32.totalorder %s18, 0
      %p66 = por %p64, %p65
      %s68 = sadd.s32 %s67, 1
      %p71 = scmp.eq.s32.totalorder %s12, 1
      %p72 = scmp.ne.s32.totalorder %s67, %s69
      %p73 = scmp.eq.s32.totalorder %s12, 0
      %p74 = por %p72, %p73
      %p75 = scmp.ne.s32.totalorder %s67, %s69
      %p76 = scmp.eq.s32.totalorder %s17, 1
      %p77 = por %p75, %p76
      %p78 = scmp.ne.s32.totalorder %s69, %s70
      %p79 = scmp.eq.s32.totalorder %s17, 0
      %p80 = por %p78, %p79
      %p81 = scmp.ne.s32.totalorder %s69, %s70
      %p82 = scmp.eq.s32.totalorder %s18, 1
      %p83 = por %p81, %p82
      %p85 = scmp.ne.s32.totalorder %s70, %s84
      %p86 = scmp.eq.s32.totalorder %s18, 0
      %p87 = por %p85, %p86
      %s88 = ssub.s32 %s12, %s19
      %p89 = scmp.eq.s32.totalorder %s88, 0
      %s91 = sadd.s32 %s90, 1
      %s92 = scalar_select %p89, %s90, %s91
      %p95 = pneg %p89
      %p96 = scmp.eq.s32.totalorder %s12, 1
      %p97 = por %p95, %p96
      %p98 = scmp.ne.s32.totalorder %s90, %s93
      %p99 = scmp.eq.s32.totalorder %s12, 0
      %p100 = por %p98, %p99
      %p101 = scmp.ne.s32.totalorder %s90, %s93
      %p102 = scmp.eq.s32.totalorder %s17, 1
      %p103 = por %p101, %p102
      %p104 = scmp.ne.s32.totalorder %s93, %s94
      %p105 = scmp.eq.s32.totalorder %s17, 0
      %p106 = por %p104, %p105
      %p107 = scmp.ne.s32.totalorder %s93, %s94
      %p108 = scmp.eq.s32.totalorder %s18, 1
      %p109 = por %p107, %p108
      %p111 = scmp.ne.s32.totalorder %s94, %s110
      %p112 = scmp.eq.s32.totalorder %s18, 0
      %p113 = por %p111, %p112
      %p114 = scmp.le.s32.totalorder 1, %s12
      %p115 = scmp.lt.s32.totalorder %s12, 3
      %p116 = pnand %p114, %p115
      %p117 = pneg %p116
      // Predicated region
      $region9: #{tpu_custom_call.1} parent=5 // pred_check
        _
      $region10: #{tpu_custom_call.1} parent=5 // pred_check_branch
        %119 = sbr.rel (%p116) target = $region12
      $region11: #{tpu_custom_call.1} parent=5 // pred_region
        %s120 = ssub.s32 %s12, 1
        // Predicated region
        $region13: #{tpu_custom_call.1} parent=11 // pred_check
          %p121 = pneg %p59
        $region14: #{tpu_custom_call.1} parent=11 // pred_check_branch
          %123 = sbr.rel (%p121) target = $region16
        $region15: #{tpu_custom_call.1} parent=11 // pred_region
          _
        $region16: #{tpu_custom_call.1} parent=11 // pred_fallthru
          _
        // Predicated region
        $region17: #{tpu_custom_call.1} parent=11 // pred_check
          %p124 = pneg %p80
        $region18: #{tpu_custom_call.1} parent=11 // pred_check_branch
          %126 = sbr.rel (%p124) target = $region20
        $region19: #{tpu_custom_call.1} parent=11 // pred_region
          _
        $region20: #{tpu_custom_call.1} parent=11 // pred_fallthru
          _
      $region12: #{tpu_custom_call.1} parent=5 // pred_fallthru
        _
      %p127 = scmp.lt.s32.totalorder %s12, 2
      // Predicated region
      $region21: #{tpu_custom_call.1} parent=5 // pred_check
        %p128 = pneg %p127
      $region22: #{tpu_custom_call.1} parent=5 // pred_check_branch
        %130 = sbr.rel (%p128) target = $region24
      $region23: #{tpu_custom_call.1} parent=5 // pred_region
        // Predicated region
        $region25: #{tpu_custom_call.1} parent=23 // pred_check
          %p131 = pneg %p32
        $region26: #{tpu_custom_call.1} parent=23 // pred_check_branch
          %133 = sbr.rel (%p131) target = $region28
        $region27: #{tpu_custom_call.1} parent=23 // pred_region
          %s134 = sand.u32 %s22, 1
          %s135 = scalar_lea.sflag [#allocation3], %s134
          %s136 = sand.u32 %s22, 1
          %s137 = smul.addr %s136, 32
          %s138 = scalar_lea.vmem [#allocation2], %s137
          %s140 = ssub.s32 512, 512
          %141 = vsyncadd %s135, %s140
          %s142 = smul.addr %s12, 4
          %s143 = smul.addr %s142, 128
          %s144 = scalar_lea.hbm %s0, %s143
          %s145 = sshll.u32 %s138, 4
          %s146 = int_to_ptr.vmem [resolvable:$true] %s145
          %151 = dma.hbm_to_vmem [thread:$0]  %s144, 512, %s146, %s135, 128, 128, 8
        $region28: #{tpu_custom_call.1} parent=23 // pred_fallthru
          _
      $region24: #{tpu_custom_call.1} parent=5 // pred_fallthru
        _
      %p152 = scmp.le.s32.totalorder 1, %s12
      %p153 = scmp.lt.s32.totalorder %s12, 3
      %p154 = pnand %p152, %p153
      %p155 = pneg %p154
      // Predicated region
      $region29: #{tpu_custom_call.1} parent=5 // pred_check
        _
      $region30: #{tpu_custom_call.1} parent=5 // pred_check_branch
        %157 = sbr.rel (%p154) target = $region32
      $region31: #{tpu_custom_call.1} parent=5 // pred_region
        %s158 = ssub.s32 %s12, 1
        %s159 = sand.u32 %s25, 1
        %s160 = scalar_lea.sflag [#allocation3], %s159
        %s161 = sand.u32 %s25, 1
        %s162 = smul.addr %s161, 32
        %s163 = scalar_lea.vmem [#allocation2], %s162
        // Predicated region
        $region33: #{tpu_custom_call.1} parent=31 // pred_check
          %p164 = pneg %p38
        $region34: #{tpu_custom_call.1} parent=31 // pred_check_branch
          %166 = sbr.rel (%p164) target = $region36
        $region35: #{tpu_custom_call.1} parent=31 // pred_region
          %167 = dma.done %s160, 512
        $region36: #{tpu_custom_call.1} parent=31 // pred_fallthru
          _
        %s168 = sand.u32 %s25, 1
        %s169 = scalar_lea.sflag [#allocation3], %s168
        %s170 = sand.u32 %s25, 1
        %s171 = smul.addr %s170, 32
        %s172 = scalar_lea.vmem [#allocation2], %s171
        %p173 = pneg %p38
        %p174 = pneg %p35
        %p175 = pneg %p59
        %p176 = pneg %p56
        %p177 = pneg %p80
        %p178 = pneg %p77
        %p179 = pneg %p106
        %p180 = pneg %p103
        %p181 = scmp.lt.s32.totalorder %s17, 1
        %s182 = scalar_select %p181, %s17, 1
        %s183 = smul.addr %s182, 16
        %s184 = smul.addr %s183, 8
        %s185 = scalar_lea.vmem %s3, %s184
        %p186 = scmp.lt.s32.totalorder %s17, 1
        %s187 = scalar_select %p186, %s17, 1
        %s188 = smul.addr %s187, 16
        %s189 = smul.addr %s188, 8
        %s190 = scalar_lea.vmem %s3, %s189
        %v191 = vld [vmem:[%s163] sm:$0xff]
        %v192 = vld [vmem:[%s163 + $0x8] sm:$0xff]
        %v193 = vld [vmem:[%s163 + $0x10] sm:$0xff]
        %v194 = vld [vmem:[%s163 + $0x18] sm:$0xff]
        %199 = vrot.lane.b32.xlu0 %v191, 112
        %v200 = vpop.permute.xlu0 %199
        %201 = vrot.lane.b32.xlu0 %v192, 112
        %v202 = vpop.permute.xlu0 %201
        %203 = vrot.lane.b32.xlu0 %v193, 112
        %v204 = vpop.permute.xlu0 %203
        %205 = vrot.lane.b32.xlu0 %v194, 112
        %v206 = vpop.permute.xlu0 %205
        %v211 = vmax.f32 %v191, %v200
        %v212 = vmax.f32 %v192, %v202
        %v213 = vmax.f32 %v193, %v204
        %v214 = vmax.f32 %v194, %v206
        %v215 = vld [vmem:[%s1] sm:$0xff]
        %v216 = vld [vmem:[%s1 + $0x8] sm:$0xff]
        %vm217 = vcmask 130048
        %v219 = vsel %vm217, %v211, 0
        %v222 = vsel %vm217, %v212, 0
        %v225 = vsel %vm217, %v213, 0
        %v228 = vsel %vm217, %v214, 0
        %230 = vmatprep.subr.mxu0 0.0
        %231 = vmatpush1.msra.mxu0 %v215
        %232 = vmatprep.subr.mxu0 0.0
        %233 = vmatpush1.msra.mxu0 %v216
        %234 = vmatprep.subr.mxu0 0.0
        %235 = vmatpush1.msra.mxu0 0.0
        %236 = vmatprep.subr.mxu0 0.0
        %237 = vmatpush1.msra.mxu0 0.0
        %238 = vmatprep.subr.mxu0 0.0
        %239 = vmatpush1.msra.mxu0 0.0
        %240 = vmatprep.subr.mxu0 0.0
        %241 = vmatpush1.msra.mxu0 0.0
        %242 = vmatprep.subr.mxu0 0.0
        %243 = vmatpush1.msra.mxu0 0.0
        %244 = vmatprep.subr.mxu0 0.0
        %245 = vmatpush1.msra.mxu0 0.0
        %246 = vmatprep.subr.mxu0 0.0
        %247 = vmatpush1.msra.mxu0 0.0
        %248 = vmatprep.subr.mxu0 0.0
        %249 = vmatpush1.msra.mxu0 0.0
        %250 = vmatprep.subr.mxu0 0.0
        %251 = vmatpush1.msra.mxu0 0.0
        %252 = vmatprep.subr.mxu0 0.0
        %253 = vmatpush1.msra.mxu0 0.0
        %254 = vmatprep.subr.mxu0 0.0
        %255 = vmatpush1.msra.mxu0 0.0
        %256 = vmatprep.subr.mxu0 0.0
        %257 = vmatpush1.msra.mxu0 0.0
        %258 = vmatprep.subr.mxu0 0.0
        %259 = vmatpush1.msra.mxu0 0.0
        %260 = vmatprep.subr.mxu0 0.0
        %261 = vmatpush1.msra.mxu0 0.0
        %262 = vmatprep.subr.mxu0 0.0
        %263 = vmatpush1.msra.mxu0 0.0
        %264 = vmatprep.subr.mxu0 0.0
        %265 = vmatpush1.msra.mxu0 0.0
        %266 = vmatprep.subr.mxu0 0.0
        %267 = vmatpush1.msra.mxu0 0.0
        %268 = vmatprep.subr.mxu0 0.0
        %269 = vmatpush1.msra.mxu0 0.0
        %270 = vmatprep.subr.mxu0 0.0
        %271 = vmatpush1.msra.mxu0 0.0
        %272 = vmatprep.subr.mxu0 0.0
        %273 = vmatpush1.msra.mxu0 0.0
        %274 = vmatprep.subr.mxu0 0.0
        %275 = vmatpush1.msra.mxu0 0.0
        %276 = vmatprep.subr.mxu0 0.0
        %277 = vmatpush1.msra.mxu0 0.0
        %278 = vmatprep.subr.mxu0 0.0
        %279 = vmatpush1.msra.mxu0 0.0
        %280 = vmatprep.subr.mxu0 0.0
        %281 = vmatpush1.msra.mxu0 0.0
        %282 = vmatprep.subr.mxu0 0.0
        %283 = vmatpush1.msra.mxu0 0.0
        %284 = vmatprep.subr.mxu0 0.0
        %285 = vmatpush1.msra.mxu0 0.0
        %286 = vmatprep.subr.mxu0 0.0
        %287 = vmatpush1.msra.mxu0 0.0
        %288 = vmatprep.subr.mxu0 0.0
        %289 = vmatpush1.msra.mxu0 0.0
        %290 = vmatprep.subr.mxu0 0.0
        %291 = vmatpush1.msra.mxu0 0.0
        %292 = vmatprep.subr.mxu0 0.0
        %293 = vmatpush1.msra.mxu0 0.0
        %294 = vmatprep.mubr.f32.mxu0 0.0
        %295 = vmatmul.mubr.f32.gmra.mrb[0].mxu0 %v219
        %v296 = vpop.f32.mrb[0].mxu0
        %v297 = vadd.f32 0.0, %v296
        %v298 = vpop.f32.mrb[0].mxu0
        %299 = vmatprep.mubr.f32.mxu0 0.0
        %300 = vmatmul.mubr.f32.gmra.mrb[0].mxu0 %v222
        %v301 = vpop.f32.mrb[0].mxu0
        %v302 = vadd.f32 0.0, %v301
        %v303 = vpop.f32.mrb[0].mxu0
        %304 = vmatprep.mubr.f32.mxu0 0.0
        %305 = vmatmul.mubr.f32.gmra.mrb[0].mxu0 %v225
        %v306 = vpop.f32.mrb[0].mxu0
        %v307 = vadd.f32 0.0, %v306
        %v308 = vpop.f32.mrb[0].mxu0
        %309 = vmatprep.mubr.f32.mxu0 0.0
        %310 = vmatmul.mubr.f32.gmra.mrb[0].mxu0 %v228
        %v311 = vpop.f32.mrb[0].mxu0
        %v312 = vadd.f32 0.0, %v311
        %v313 = vpop.f32.mrb[0].mxu0
        %314 = vdwg.mxu0
        %v315 = vld [vmem:[%s2] sm:$0xff]
        %v316 = vld [vmem:[%s2 + $0x8] sm:$0xff]
        %317 = vmatprep.subr.mxu0 0.0
        %318 = vmatpush1.msra.mxu0 %v315
        %319 = vmatprep.subr.mxu0 0.0
        %320 = vmatpush1.msra.mxu0 %v316
        %321 = vmatprep.subr.mxu0 0.0
        %322 = vmatpush1.msra.mxu0 0.0
        %323 = vmatprep.subr.mxu0 0.0
        %324 = vmatpush1.msra.mxu0 0.0
        %325 = vmatprep.subr.mxu0 0.0
        %326 = vmatpush1.msra.mxu0 0.0
        %327 = vmatprep.subr.mxu0 0.0
        %328 = vmatpush1.msra.mxu0 0.0
        %329 = vmatprep.subr.mxu0 0.0
        %330 = vmatpush1.msra.mxu0 0.0
        %331 = vmatprep.subr.mxu0 0.0
        %332 = vmatpush1.msra.mxu0 0.0
        %333 = vmatprep.subr.mxu0 0.0
        %334 = vmatpush1.msra.mxu0 0.0
        %335 = vmatprep.subr.mxu0 0.0
        %336 = vmatpush1.msra.mxu0 0.0
        %337 = vmatprep.subr.mxu0 0.0
        %338 = vmatpush1.msra.mxu0 0.0
        %339 = vmatprep.subr.mxu0 0.0
        %340 = vmatpush1.msra.mxu0 0.0
        %341 = vmatprep.subr.mxu0 0.0
        %342 = vmatpush1.msra.mxu0 0.0
        %343 = vmatprep.subr.mxu0 0.0
        %344 = vmatpush1.msra.mxu0 0.0
        %345 = vmatprep.subr.mxu0 0.0
        %346 = vmatpush1.msra.mxu0 0.0
        %347 = vmatprep.subr.mxu0 0.0
        %348 = vmatpush1.msra.mxu0 0.0
        %349 = vmatprep.subr.mxu0 0.0
        %350 = vmatpush1.msra.mxu0 0.0
        %351 = vmatprep.subr.mxu0 0.0
        %352 = vmatpush1.msra.mxu0 0.0
        %353 = vmatprep.subr.mxu0 0.0
        %354 = vmatpush1.msra.mxu0 0.0
        %355 = vmatprep.subr.mxu0 0.0
        %356 = vmatpush1.msra.mxu0 0.0
        %357 = vmatprep.subr.mxu0 0.0
        %358 = vmatpush1.msra.mxu0 0.0
        %359 = vmatprep.subr.mxu0 0.0
        %360 = vmatpush1.msra.mxu0 0.0
        %361 = vmatprep.subr.mxu0 0.0
        %362 = vmatpush1.msra.mxu0 0.0
        %363 = vmatprep.subr.mxu0 0.0
        %364 = vmatpush1.msra.mxu0 0.0
        %365 = vmatprep.subr.mxu0 0.0
        %366 = vmatpush1.msra.mxu0 0.0
        %367 = vmatprep.subr.mxu0 0.0
        %368 = vmatpush1.msra.mxu0 0.0
        %369 = vmatprep.subr.mxu0 0.0
        %370 = vmatpush1.msra.mxu0 0.0
        %371 = vmatprep.subr.mxu0 0.0
        %372 = vmatpush1.msra.mxu0 0.0
        %373 = vmatprep.subr.mxu0 0.0
        %374 = vmatpush1.msra.mxu0 0.0
        %375 = vmatprep.subr.mxu0 0.0
        %376 = vmatpush1.msra.mxu0 0.0
        %377 = vmatprep.subr.mxu0 0.0
        %378 = vmatpush1.msra.mxu0 0.0
        %379 = vmatprep.subr.mxu0 0.0
        %380 = vmatpush1.msra.mxu0 0.0
        %381 = vmatprep.mubr.f32.mxu0 0.0
        %382 = vmatmul.mubr.f32.gmra.mrb[0].mxu0 %v219
        %v383 = vpop.f32.mrb[0].mxu0
        %v384 = vadd.f32 0.0, %v383
        %v385 = vpop.f32.mrb[0].mxu0
        %386 = vmatprep.mubr.f32.mxu0 0.0
        %387 = vmatmul.mubr.f32.gmra.mrb[0].mxu0 %v222
        %v388 = vpop.f32.mrb[0].mxu0
        %v389 = vadd.f32 0.0, %v388
        %v390 = vpop.f32.mrb[0].mxu0
        %391 = vmatprep.mubr.f32.mxu0 0.0
        %392 = vmatmul.mubr.f32.gmra.mrb[0].mxu0 %v225
        %v393 = vpop.f32.mrb[0].mxu0
        %v394 = vadd.f32 0.0, %v393
        %v395 = vpop.f32.mrb[0].mxu0
        %396 = vmatprep.mubr.f32.mxu0 0.0
        %397 = vmatmul.mubr.f32.gmra.mrb[0].mxu0 %v228
        %v398 = vpop.f32.mrb[0].mxu0
        %v399 = vadd.f32 0.0, %v398
        %v400 = vpop.f32.mrb[0].mxu0
        %401 = vdwg.mxu0
        %v402 = vmax.f32 %v297, %v384
        %v403 = vmax.f32 %v302, %v389
        %v404 = vmax.f32 %v307, %v394
        %v405 = vmax.f32 %v312, %v399
        %vm406 = vcmask 64512
        %407 = vst.msk [vmem:[%s190] sm:$0xff] %vm406, %v402
        %408 = vst.msk [vmem:[%s190 + $0x8] sm:$0xff] %vm406, %v403
        %409 = vst.msk [vmem:[%s190 + $0x10] sm:$0xff] %vm406, %v404
        %410 = vst.msk [vmem:[%s190 + $0x18] sm:$0xff] %vm406, %v405
        %411 = vst.msk [vmem:[%s190 + $0x20] sm:$0xff] %vm406, %v402
        %412 = vst.msk [vmem:[%s190 + $0x28] sm:$0xff] %vm406, %v403
        %413 = vst.msk [vmem:[%s190 + $0x30] sm:$0xff] %vm406, %v404
        %414 = vst.msk [vmem:[%s190 + $0x38] sm:$0xff] %vm406, %v405
        %415 = vst.msk [vmem:[%s190 + $0x40] sm:$0xff] %vm406, %v402
        %416 = vst.msk [vmem:[%s190 + $0x48] sm:$0xff] %vm406, %v403
        %417 = vst.msk [vmem:[%s190 + $0x50] sm:$0xff] %vm406, %v404
        %418 = vst.msk [vmem:[%s190 + $0x58] sm:$0xff] %vm406, %v405
        %419 = vst.msk [vmem:[%s190 + $0x60] sm:$0xff] %vm406, %v402
        %420 = vst.msk [vmem:[%s190 + $0x68] sm:$0xff] %vm406, %v403
        %421 = vst.msk [vmem:[%s190 + $0x70] sm:$0xff] %vm406, %v404
        %422 = vst.msk [vmem:[%s190 + $0x78] sm:$0xff] %vm406, %v405
        %p423 = scmp.lt.s32.totalorder %s17, 1
        %s424 = scalar_select %p423, %s17, 1
        %s425 = smul.addr %s424, 16
        %s426 = smul.addr %s425, 8
        %s427 = scalar_lea.vmem %s3, %s426
        // Predicated region
        $region37: #{tpu_custom_call.1} parent=31 // pred_check
          %p428 = pneg %p103
        $region38: #{tpu_custom_call.1} parent=31 // pred_check_branch
          %430 = sbr.rel (%p428) target = $region40
        $region39: #{tpu_custom_call.1} parent=31 // pred_region
          _
        $region40: #{tpu_custom_call.1} parent=31 // pred_fallthru
          _
      $region32: #{tpu_custom_call.1} parent=5 // pred_fallthru
        _
      %p431 = scmp.le.s32.totalorder 2, %s12
      // Predicated region
      $region41: #{tpu_custom_call.1} parent=5 // pred_check
        %p432 = pneg %p431
      $region42: #{tpu_custom_call.1} parent=5 // pred_check_branch
        %434 = sbr.rel (%p432) target = $region44
      $region43: #{tpu_custom_call.1} parent=5 // pred_region
        %s435 = ssub.s32 %s12, 2
        // Predicated region
        $region45: #{tpu_custom_call.1} parent=43 // pred_check
          %p436 = pneg %p109
        $region46: #{tpu_custom_call.1} parent=43 // pred_check_branch
          %438 = sbr.rel (%p436) target = $region48
        $region47: #{tpu_custom_call.1} parent=43 // pred_region
          %p439 = scmp.lt.s32.totalorder %s18, 1
          %s440 = scalar_select %p439, %s18, 1
          %s441 = smul.addr %s440, 16
          %s442 = smul.addr %s441, 8
          %s443 = scalar_lea.vmem %s3, %s442
        $region48: #{tpu_custom_call.1} parent=43 // pred_fallthru
          _
      $region44: #{tpu_custom_call.1} parent=5 // pred_fallthru
        _
    $region6: #{tpu_custom_call.1} parent=1 // loop_footer
      %s16 = sadd.s32 1, %s12
    $region7: #{tpu_custom_call.1} parent=1 // loop_footer_branch
      %11 = sbr.rel target = $region3
    $region8: #{tpu_custom_call.1} parent=1 // loop_exit
      _
    %444 = vsyncpa [#allocation3], 1
    %s445 = scalar_lea.sflag [#allocation3], 1
    %446 = vsyncpa %s445, 1

</llo_original>
